<compile_context>
chip_gen: v7x
topology: tpu7x:2x2x1
jax: 0.10.0
libtpu: 0.0.40
codegen_flags: <defaults>
</compile_context>

<pallas_src>
import functools

import jax
import jax.numpy as jnp
import numpy as np
from jax.experimental import pallas as pl
from jax.experimental.pallas import tpu as pltpu


def _round_up(n, m):
    return ((n + m - 1) // m) * m


def dqn_kernel(x_ref, w_ref, b_ref, o_ref):
    # x_ref : (TB, HP)    bf16  -- zero-padded batch tile (features padded to HP)
    # w_ref : (3, HP, HP) bf16  -- zero-padded weight slabs (VMEM-resident)
    # b_ref : (3, HP)     f32   -- zero-padded biases        (VMEM-resident)
    # o_ref : (TB, HP)    f32   -- lane-dense padded output tile
    cd = w_ref.dtype

    # Layer 1: (TB, HP) @ (HP, HP) -> f32 accum; bias + ReLU in f32.
    h = jnp.dot(x_ref[...], w_ref[0], preferred_element_type=jnp.float32)
    h = jnp.maximum(h + b_ref[0:1, :], 0.0)

    # Layer 2: padded columns stay exactly zero (zero weights + zero bias).
    h = jnp.dot(h.astype(cd), w_ref[1], preferred_element_type=jnp.float32)
    h = jnp.maximum(h + b_ref[1:2, :], 0.0)

    # Layer 3 (no activation); padded rows of w3 are zero so padding is inert.
    out = jnp.dot(h.astype(cd), w_ref[2], preferred_element_type=jnp.float32)
    o_ref[...] = (out + b_ref[2:3, :]).astype(o_ref.dtype)


def pack_params(params, compute_dtype=jnp.bfloat16):
    """Pack 3 (W, b) pairs into one padded weight slab + one bias slab.

    Done ONCE outside the per-step forward: 2 VMEM-resident buffers instead of
    6 tiny DMAs, and zero repacking cost per forward call.
    """
    w1, b1, w2, b2, w3, b3 = params
    S, H1 = w1.shape
    H2, A = w2.shape[1], w3.shape[1]
    HP = _round_up(max(128, S, H1, H2, A), 128)  # 128 for the CartPole DQN

    wslab = jnp.zeros((3, HP, HP), compute_dtype)
    wslab = wslab.at[0, :S, :H1].set(w1.astype(compute_dtype))
    wslab = wslab.at[1, :H1, :H2].set(w2.astype(compute_dtype))
    wslab = wslab.at[2, :H2, :A].set(w3.astype(compute_dtype))

    bslab = jnp.zeros((3, HP), jnp.float32)
    bslab = bslab.at[0, :H1].set(b1.reshape(-1).astype(jnp.float32))
    bslab = bslab.at[1, :H2].set(b2.reshape(-1).astype(jnp.float32))
    bslab = bslab.at[2, :A].set(b3.reshape(-1).astype(jnp.float32))
    return wslab, bslab


@functools.partial(jax.jit, static_argnames=("action_size", "block_b"))
def dqn_forward_packed(x, wslab, bslab, *, action_size, block_b=None):
    B, S = x.shape
    HP = wslab.shape[-1]

    # Big batch tiles amortize the ~0.35us per-grid-step overhead; the
    # "parallel" axis lets Mosaic shard batch tiles across the 2 TCs on v7x.
    if block_b is None:
        block_b = 256 if B >= 256 else max(8, _round_up(B, 8))
    Bp = _round_up(max(B, block_b), block_b)

    # Zero-pad x to (Bp, HP): lane-dense tiles, no sub-(8,128) slicing in-kernel.
    x_c = jnp.zeros((Bp, HP), wslab.dtype).at[:B, :S].set(x.astype(wslab.dtype))

    out = pl.pallas_call(
        dqn_kernel,
        out_shape=jax.ShapeDtypeStruct((Bp, HP), jnp.float32),
        grid=(Bp // block_b,),
        in_specs=[
            pl.BlockSpec((block_b, HP), lambda i: (i, 0)),    # batch-tiled x
            pl.BlockSpec((3, HP, HP), lambda i: (0, 0, 0)),   # resident weights
            pl.BlockSpec((3, HP), lambda i: (0, 0)),          # resident biases
        ],
        out_specs=pl.BlockSpec((block_b, HP), lambda i: (i, 0)),  # lane-dense
        compiler_params=pltpu.CompilerParams(
            dimension_semantics=("parallel",)),
    )(x_c, wslab, bslab)
    return out[:B, :action_size]


def dqn_forward(x, params, *, compute_dtype=jnp.bfloat16, block_b=None):
    """Convenience wrapper: pack + run. Prefer pack_params once + *_packed in loops."""
    action_size = params[4].shape[1]
    wslab, bslab = pack_params(params, compute_dtype)
    return dqn_forward_packed(x, wslab, bslab, action_size=action_size,
                              block_b=block_b)


def init_params(key, state_size, action_size):
    # Deterministic init mimicking PyTorch's default Linear init:
    # U(-1/sqrt(fan_in), 1/sqrt(fan_in)) for both weight and bias.
    dims = [(state_size, 128), (128, 64), (64, action_size)]
    params = []
    for fan_in, fan_out in dims:
        key, kw, kb = jax.random.split(key, 3)
        bound = 1.0 / np.sqrt(fan_in)
        w = jax.random.uniform(kw, (fan_in, fan_out), jnp.float32, -bound, bound)
        b = jax.random.uniform(kb, (1, fan_out), jnp.float32, -bound, bound)
        params.extend([w, b])
    return tuple(params)


def dqn_reference_matched(x, params, compute_dtype=jnp.bfloat16):
    # Same bf16-inputs / f32-accumulation recipe as the kernel.
    w1, b1, w2, b2, w3, b3 = params
    cd = compute_dtype
    h = jnp.dot(x.astype(cd), w1.astype(cd), preferred_element_type=jnp.float32) + b1
    h = jnp.maximum(h, 0.0)
    h = jnp.dot(h.astype(cd), w2.astype(cd), preferred_element_type=jnp.float32) + b2
    h = jnp.maximum(h, 0.0)
    return jnp.dot(h.astype(cd), w3.astype(cd), preferred_element_type=jnp.float32) + b3


def dqn_reference_f32(x, params):
    w1, b1, w2, b2, w3, b3 = params
    h1 = jnp.maximum(x @ w1 + b1, 0.0)
    h2 = jnp.maximum(h1 @ w2 + b2, 0.0)
    return h2 @ w3 + b3


if __name__ == "__main__":
    # CartPole-style sizes: state_size=4, action_size=2.
    state_size, action_size = 4, 2
    key = jax.random.PRNGKey(0)
    key, kx = jax.random.split(key)
    params = init_params(key, state_size, action_size)

    # Pack the weights once (would sit outside the env/training loop).
    wslab, bslab = pack_params(params)

    # Small inference-style batch.
    x_small = jax.random.normal(kx, (8, state_size), jnp.float32)
    out_small = jax.block_until_ready(
        dqn_forward_packed(x_small, wslab, bslab, action_size=action_size))
    np.testing.assert_allclose(
        np.asarray(out_small), np.asarray(dqn_reference_matched(x_small, params)),
        rtol=1e-3, atol=1e-3)
    np.testing.assert_allclose(
        np.asarray(out_small), np.asarray(dqn_reference_f32(x_small, params)),
        rtol=5e-2, atol=5e-2)

    # Replay-buffer-sized batch exercising the tiled / pipelined grid path.
    key, kb = jax.random.split(key)
    x_big = jax.random.normal(kb, (512, state_size), jnp.float32)
    out_big = jax.block_until_ready(
        dqn_forward_packed(x_big, wslab, bslab, action_size=action_size))
    np.testing.assert_allclose(
        np.asarray(out_big), np.asarray(dqn_reference_matched(x_big, params)),
        rtol=1e-3, atol=1e-3)

    # Convenience path (pack + run in one call) also works.
    out_conv = jax.block_until_ready(dqn_forward(x_small, params))
    np.testing.assert_allclose(np.asarray(out_conv), np.asarray(out_small),
                               rtol=1e-5, atol=1e-5)

    print("KERNEL_OK")
</pallas_src>

<mosaic_0001>
module attributes {stable_mosaic.version = 11 : i64} {
  func.func @dqn_kernel(%arg0: i32, %arg1: memref<8x128xbf16, #tpu.memory_space<vmem>>, %arg2: memref<3x128x128xbf16, #tpu.memory_space<vmem>>, %arg3: memref<3x128xf32, #tpu.memory_space<vmem>>, %arg4: memref<8x128xf32, #tpu.memory_space<vmem>>) attributes {dimension_semantics = [#tpu.dimension_semantics<parallel>], iteration_bounds = array<i64: 1>, scalar_prefetch = 0 : i64, scratch_operands = 0 : i64, tpu.core_type = #tpu.core_type<tc>, window_params = [{transform_indices = @transform_0, window_bounds = array<i64: 8, 128>}, {pipeline_mode = #tpu.pipeline_mode<synchronous>, transform_indices = @transform_1, window_bounds = array<i64: 3, 128, 128>}, {pipeline_mode = #tpu.pipeline_mode<synchronous>, transform_indices = @transform_2, window_bounds = array<i64: 3, 128>}, {transform_indices = @transform_3, window_bounds = array<i64: 8, 128>}]} {
    %c0 = arith.constant 0 : index
    %c0_0 = arith.constant 0 : index
    %0 = vector.load %arg1[%c0, %c0_0] : memref<8x128xbf16, #tpu.memory_space<vmem>>, vector<8x128xbf16>
    %c0_1 = arith.constant 0 : index
    %c0_2 = arith.constant 0 : index
    %c0_3 = arith.constant 0 : index
    %1 = vector.load %arg2[%c0_1, %c0_2, %c0_3] : memref<3x128x128xbf16, #tpu.memory_space<vmem>>, vector<1x128x128xbf16>
    %2 = vector.shape_cast %1 : vector<1x128x128xbf16> to vector<128x128xbf16>
    %cst = arith.constant dense<0.000000e+00> : vector<8x128xf32>
    %3 = tpu.matmul %0, %2, %cst {dimension_numbers = #tpu.dot_dimension_numbers<[1], [0], [0], [1], [0, 0, 1, 1], [], []>} : vector<8x128xbf16>, vector<128x128xbf16>, vector<8x128xf32> -> vector<8x128xf32>
    %c0_4 = arith.constant 0 : index
    %c0_5 = arith.constant 0 : index
    %4 = vector.load %arg3[%c0_4, %c0_5] : memref<3x128xf32, #tpu.memory_space<vmem>>, vector<1x128xf32>
    %5 = vector.broadcast %4 : vector<1x128xf32> to vector<8x128xf32>
    %6 = arith.addf %3, %5 : vector<8x128xf32>
    %cst_6 = arith.constant 0.000000e+00 : f32
    %7 = vector.broadcast %cst_6 : f32 to vector<8x128xf32>
    %8 = arith.maximumf %6, %7 : vector<8x128xf32>
    %9 = arith.truncf %8 : vector<8x128xf32> to vector<8x128xbf16>
    %c1 = arith.constant 1 : index
    %c0_7 = arith.constant 0 : index
    %c0_8 = arith.constant 0 : index
    %10 = vector.load %arg2[%c1, %c0_7, %c0_8] : memref<3x128x128xbf16, #tpu.memory_space<vmem>>, vector<1x128x128xbf16>
    %11 = vector.shape_cast %10 : vector<1x128x128xbf16> to vector<128x128xbf16>
    %cst_9 = arith.constant dense<0.000000e+00> : vector<8x128xf32>
    %12 = tpu.matmul %9, %11, %cst_9 {dimension_numbers = #tpu.dot_dimension_numbers<[1], [0], [0], [1], [0, 0, 1, 1], [], []>} : vector<8x128xbf16>, vector<128x128xbf16>, vector<8x128xf32> -> vector<8x128xf32>
    %c1_10 = arith.constant 1 : index
    %c0_11 = arith.constant 0 : index
    %13 = vector.load %arg3[%c1_10, %c0_11] : memref<3x128xf32, #tpu.memory_space<vmem>>, vector<1x128xf32>
    %14 = vector.broadcast %13 : vector<1x128xf32> to vector<8x128xf32>
    %15 = arith.addf %12, %14 : vector<8x128xf32>
    %cst_12 = arith.constant 0.000000e+00 : f32
    %16 = vector.broadcast %cst_12 : f32 to vector<8x128xf32>
    %17 = arith.maximumf %15, %16 : vector<8x128xf32>
    %18 = arith.truncf %17 : vector<8x128xf32> to vector<8x128xbf16>
    %c2 = arith.constant 2 : index
    %c0_13 = arith.constant 0 : index
    %c0_14 = arith.constant 0 : index
    %19 = vector.load %arg2[%c2, %c0_13, %c0_14] : memref<3x128x128xbf16, #tpu.memory_space<vmem>>, vector<1x128x128xbf16>
    %20 = vector.shape_cast %19 : vector<1x128x128xbf16> to vector<128x128xbf16>
    %cst_15 = arith.constant dense<0.000000e+00> : vector<8x128xf32>
    %21 = tpu.matmul %18, %20, %cst_15 {dimension_numbers = #tpu.dot_dimension_numbers<[1], [0], [0], [1], [0, 0, 1, 1], [], []>} : vector<8x128xbf16>, vector<128x128xbf16>, vector<8x128xf32> -> vector<8x128xf32>
    %c2_16 = arith.constant 2 : index
    %c0_17 = arith.constant 0 : index
    %22 = vector.load %arg3[%c2_16, %c0_17] : memref<3x128xf32, #tpu.memory_space<vmem>>, vector<1x128xf32>
    %23 = vector.broadcast %22 : vector<1x128xf32> to vector<8x128xf32>
    %24 = arith.addf %21, %23 : vector<8x128xf32>
    %c0_18 = arith.constant 0 : index
    %c0_19 = arith.constant 0 : index
    %25 = vector.load %arg4[%c0_18, %c0_19] : memref<8x128xf32, #tpu.memory_space<vmem>>, vector<8x128xf32>
    tpu.vector_store %arg4[%c0_18, %c0_19], %24 {strides = array<i32>} : memref<8x128xf32, #tpu.memory_space<vmem>>, vector<8x128xf32>,
    return
  }
  func.func @transform_0(%arg0: i32) -> (i32, i32) {
    %c0_i32 = arith.constant 0 : i32
    %c0_i32_0 = arith.constant 0 : i32
    return %arg0, %c0_i32 : i32, i32
  }
  func.func @transform_1(%arg0: i32) -> (i32, i32, i32) {
    %c0_i32 = arith.constant 0 : i32
    %c0_i32_0 = arith.constant 0 : i32
    %c0_i32_1 = arith.constant 0 : i32
    %c0_i32_2 = arith.constant 0 : i32
    return %c0_i32, %c0_i32_0, %c0_i32_1 : i32, i32, i32
  }
  func.func @transform_2(%arg0: i32) -> (i32, i32) {
    %c0_i32 = arith.constant 0 : i32
    %c0_i32_0 = arith.constant 0 : i32
    %c0_i32_1 = arith.constant 0 : i32
    return %c0_i32, %c0_i32_0 : i32, i32
  }
  func.func @transform_3(%arg0: i32) -> (i32, i32) {
    %c0_i32 = arith.constant 0 : i32
    %c0_i32_0 = arith.constant 0 : i32
    return %arg0, %c0_i32 : i32, i32
  }
}

</mosaic_0001>

<llo_original>
// kernel: dqn_forward_packed.1
$region0: #{dqn_forward_packed.1}
  #allocation0 [shape = 'u32[]', space=smem, size = 0x4, offset = 0x4, fixed_abs, tag = 'smem constant byte address 0x4 - core index']
  #allocation1 [shape = 'u32[144,128]{1,0:T(1,128)}', space=vmem, size = 0x12000, scoped, tag = 'internal scratch']
  %s0 = inlined_call_operand.vmem [shape: bf16[8,128], index: 0, kind: input, shape index: {}]
  %s1 = inlined_call_operand.hbm [shape: bf16[3,128,128], index: 1, kind: input, shape index: {}]
  %s2 = inlined_call_operand.vmem [shape: f32[3,128], index: 2, kind: input, shape index: {}]
  %s3 = inlined_call_operand.vmem [shape: f32[8,128], index: 3, kind: output, shape index: {}]
  %s4 = sld [smem:[#allocation0]]
  $region26: #{dqn_forward_packed.1} parent=0
    _
  %s6 = ssub.s32 1, %s4
  %s7 = scalar_select 0, %s6, %s4
  $region1: #{dqn_forward_packed.1} parent=0
    #allocation2 [shape = 'u8[98304]{0}', space=vmem, size = 0x18000, scoped, tag = 'input window, operand 1, single buffered']
    #allocation3 [shape = 's32[1]{0}', space=sflag, size = 0x4, scoped, tag = 'scoped memory for dqn_forward_packed.1']
    %8 = vsyncpa [#allocation3], 0
    // Predicated region
    $region2: #{dqn_forward_packed.1} parent=1 // pred_check
      _
    $region3: #{dqn_forward_packed.1} parent=1 // pred_check_branch
      %10 = sbr.rel (0) target = $region5
    $region4: #{dqn_forward_packed.1} parent=1 // pred_region
      _
    $region5: #{dqn_forward_packed.1} parent=1 // pred_fallthru
      _
    // Predicated region
    $region6: #{dqn_forward_packed.1} parent=1 // pred_check
      _
    $region7: #{dqn_forward_packed.1} parent=1 // pred_check_branch
      %12 = sbr.rel (0) target = $region9
    $region8: #{dqn_forward_packed.1} parent=1 // pred_region
      %s14 = ssub.s32 3072, 3072
      %15 = vsyncadd [#allocation3], %s14
      %s16 = sshll.u32 [#allocation2], 4
      %s17 = int_to_ptr.vmem [resolvable:$true] %s16
      %22 = dma.hbm_to_vmem [thread:$0]  %s1, 3072, %s17, [#allocation3], 64, 64, 4
    $region9: #{dqn_forward_packed.1} parent=1 // pred_fallthru
      _
    // Predicated region
    $region10: #{dqn_forward_packed.1} parent=1 // pred_check
      _
    $region11: #{dqn_forward_packed.1} parent=1 // pred_check_branch
      %24 = sbr.rel (0) target = $region13
    $region12: #{dqn_forward_packed.1} parent=1 // pred_region
      _
    $region13: #{dqn_forward_packed.1} parent=1 // pred_fallthru
      _
    // Predicated region
    $region14: #{dqn_forward_packed.1} parent=1 // pred_check
      _
    $region15: #{dqn_forward_packed.1} parent=1 // pred_check_branch
      %26 = sbr.rel (0) target = $region17
    $region16: #{dqn_forward_packed.1} parent=1 // pred_region
      %27 = dma.done [#allocation3], 3072
    $region17: #{dqn_forward_packed.1} parent=1 // pred_fallthru
      _
    %v29 = vld [vmem:[%s0] sm:$0xf]
    %v30 = vld [vmem:[#allocation2] sm:$0xf]
    %v31 = vld [vmem:[#allocation2 + $0x4] sm:$0xf]
    %v32 = vld [vmem:[#allocation2 + $0x8] sm:$0xf]
    %v33 = vld [vmem:[#allocation2 + $0xc] sm:$0xf]
    %v34 = vld [vmem:[#allocation2 + $0x10] sm:$0xf]
    %v35 = vld [vmem:[#allocation2 + $0x14] sm:$0xf]
    %v36 = vld [vmem:[#allocation2 + $0x18] sm:$0xf]
    %v37 = vld [vmem:[#allocation2 + $0x1c] sm:$0xf]
    %v38 = vld [vmem:[#allocation2 + $0x20] sm:$0xf]
    %v39 = vld [vmem:[#allocation2 + $0x24] sm:$0xf]
    %v40 = vld [vmem:[#allocation2 + $0x28] sm:$0xf]
    %v41 = vld [vmem:[#allocation2 + $0x2c] sm:$0xf]
    %v42 = vld [vmem:[#allocation2 + $0x30] sm:$0xf]
    %v43 = vld [vmem:[#allocation2 + $0x34] sm:$0xf]
    %v44 = vld [vmem:[#allocation2 + $0x38] sm:$0xf]
    %v45 = vld [vmem:[#allocation2 + $0x3c] sm:$0xf]
    %v46 = vld [vmem:[%s2] sm:$0x1]
    %v47 = vlaneseq
    %v48 = vshrl.u32 %v47, 7
    %v49 = vsub.s32 0, %v48
    %v50 = vrot.slane %v46, %v49
    %v67 = vunpack.c.l.b16 %v30
    %v68 = vunpack.c.l.b16 %v31
    %v69 = vunpack.c.l.b16 %v32
    %v70 = vunpack.c.l.b16 %v33
    %v71 = vunpack.c.l.b16 %v34
    %v72 = vunpack.c.l.b16 %v35
    %v73 = vunpack.c.l.b16 %v36
    %v74 = vunpack.c.l.b16 %v37
    %v75 = vunpack.c.l.b16 %v38
    %v76 = vunpack.c.l.b16 %v39
    %v77 = vunpack.c.l.b16 %v40
    %v78 = vunpack.c.l.b16 %v41
    %v79 = vunpack.c.l.b16 %v42
    %v80 = vunpack.c.l.b16 %v43
    %v81 = vunpack.c.l.b16 %v44
    %v82 = vunpack.c.l.b16 %v45
    %v83 = vpack.c.b16 %v68, %v67
    %v84 = vpack.c.b16 %v70, %v69
    %v85 = vpack.c.b16 %v72, %v71
    %v86 = vpack.c.b16 %v74, %v73
    %v87 = vpack.c.b16 %v76, %v75
    %v88 = vpack.c.b16 %v78, %v77
    %v89 = vpack.c.b16 %v80, %v79
    %v90 = vpack.c.b16 %v82, %v81
    %99 = vmatprep.subr.bf16.mxu0 0
    %100 = vmatpush1.bf16.msra.mxu0 %v83
    %101 = vmatprep.subr.bf16.mxu0 0
    %102 = vmatpush1.bf16.msra.mxu0 %v84
    %103 = vmatprep.subr.bf16.mxu0 0
    %104 = vmatpush1.bf16.msra.mxu0 %v85
    %105 = vmatprep.subr.bf16.mxu0 0
    %106 = vmatpush1.bf16.msra.mxu0 %v86
    %107 = vmatprep.subr.bf16.mxu0 0
    %108 = vmatpush1.bf16.msra.mxu0 %v87
    %109 = vmatprep.subr.bf16.mxu0 0
    %110 = vmatpush1.bf16.msra.mxu0 %v88
    %111 = vmatprep.subr.bf16.mxu0 0
    %112 = vmatpush1.bf16.msra.mxu0 %v89
    %113 = vmatprep.subr.bf16.mxu0 0
    %114 = vmatpush1.bf16.msra.mxu0 %v90
    %115 = vmatprep.subr.bf16.mxu0 0
    %116 = vmatpush1.bf16.msra.mxu0 0
    %117 = vmatprep.subr.bf16.mxu0 0
    %118 = vmatpush1.bf16.msra.mxu0 0
    %119 = vmatprep.subr.bf16.mxu0 0
    %120 = vmatpush1.bf16.msra.mxu0 0
    %121 = vmatprep.subr.bf16.mxu0 0
    %122 = vmatpush1.bf16.msra.mxu0 0
    %123 = vmatprep.subr.bf16.mxu0 0
    %124 = vmatpush1.bf16.msra.mxu0 0
    %125 = vmatprep.subr.bf16.mxu0 0
    %126 = vmatpush1.bf16.msra.mxu0 0
    %127 = vmatprep.subr.bf16.mxu0 0
    %128 = vmatpush1.bf16.msra.mxu0 0
    %129 = vmatprep.subr.bf16.mxu0 0
    %130 = vmatpush1.bf16.msra.mxu0 0
    %131 = vmatprep.mubr.bf16.mxu0 0
    %132 = vmatmul.mubr.bf16.gmra.mrb[0].mxu0 %v29
    %v133 = vpop.f32.mrb[0].mxu0
    %v134 = vadd.f32 %v50, %v133
    %v135 = vpop.f32.mrb[0].mxu0
    %v136 = vpop.f32.mrb[0].mxu0
    %v137 = vpop.f32.mrb[0].mxu0
    %138 = vdwg.mxu0
    %v139 = vmax.f32 %v134, 0.0
    %v140 = vpack.c.bf16 %v139, %v139
    %s141 = scalar_lea.vmem [#allocation2], 64
    %v142 = vld [vmem:[%s141] sm:$0xf]
    %v143 = vld [vmem:[%s141 + $0x4] sm:$0xf]
    %v144 = vld [vmem:[%s141 + $0x8] sm:$0xf]
    %v145 = vld [vmem:[%s141 + $0xc] sm:$0xf]
    %v146 = vld [vmem:[%s141 + $0x10] sm:$0xf]
    %v147 = vld [vmem:[%s141 + $0x14] sm:$0xf]
    %v148 = vld [vmem:[%s141 + $0x18] sm:$0xf]
    %v149 = vld [vmem:[%s141 + $0x1c] sm:$0xf]
    %v150 = vld [vmem:[%s141 + $0x20] sm:$0xf]
    %v151 = vld [vmem:[%s141 + $0x24] sm:$0xf]
    %v152 = vld [vmem:[%s141 + $0x28] sm:$0xf]
    %v153 = vld [vmem:[%s141 + $0x2c] sm:$0xf]
    %v154 = vld [vmem:[%s141 + $0x30] sm:$0xf]
    %v155 = vld [vmem:[%s141 + $0x34] sm:$0xf]
    %v156 = vld [vmem:[%s141 + $0x38] sm:$0xf]
    %v157 = vld [vmem:[%s141 + $0x3c] sm:$0xf]
    %v158 = vld [vmem:[%s2 + $0x1] sm:$0x1]
    %v159 = vlaneseq
    %v160 = vshrl.u32 %v159, 7
    %v161 = vsub.s32 0, %v160
    %v162 = vrot.slane %v158, %v161
    %v179 = vunpack.c.l.b16 %v142
    %v180 = vunpack.c.l.b16 %v143
    %v181 = vunpack.c.l.b16 %v144
    %v182 = vunpack.c.l.b16 %v145
    %v183 = vunpack.c.l.b16 %v146
    %v184 = vunpack.c.l.b16 %v147
    %v185 = vunpack.c.l.b16 %v148
    %v186 = vunpack.c.l.b16 %v149
    %v187 = vunpack.c.l.b16 %v150
    %v188 = vunpack.c.l.b16 %v151
    %v189 = vunpack.c.l.b16 %v152
    %v190 = vunpack.c.l.b16 %v153
    %v191 = vunpack.c.l.b16 %v154
    %v192 = vunpack.c.l.b16 %v155
    %v193 = vunpack.c.l.b16 %v156
    %v194 = vunpack.c.l.b16 %v157
    %v195 = vpack.c.b16 %v180, %v179
    %v196 = vpack.c.b16 %v182, %v181
    %v197 = vpack.c.b16 %v184, %v183
    %v198 = vpack.c.b16 %v186, %v185
    %v199 = vpack.c.b16 %v188, %v187
    %v200 = vpack.c.b16 %v190, %v189
    %v201 = vpack.c.b16 %v192, %v191
    %v202 = vpack.c.b16 %v194, %v193
    %211 = vmatprep.subr.bf16.mxu0 0
    %212 = vmatpush1.bf16.msra.mxu0 %v195
    %213 = vmatprep.subr.bf16.mxu0 0
    %214 = vmatpush1.bf16.msra.mxu0 %v196
    %215 = vmatprep.subr.bf16.mxu0 0
    %216 = vmatpush1.bf16.msra.mxu0 %v197
    %217 = vmatprep.subr.bf16.mxu0 0
    %218 = vmatpush1.bf16.msra.mxu0 %v198
    %219 = vmatprep.subr.bf16.mxu0 0
    %220 = vmatpush1.bf16.msra.mxu0 %v199
    %221 = vmatprep.subr.bf16.mxu0 0
    %222 = vmatpush1.bf16.msra.mxu0 %v200
    %223 = vmatprep.subr.bf16.mxu0 0
    %224 = vmatpush1.bf16.msra.mxu0 %v201
    %225 = vmatprep.subr.bf16.mxu0 0
    %226 = vmatpush1.bf16.msra.mxu0 %v202
    %227 = vmatprep.subr.bf16.mxu0 0
    %228 = vmatpush1.bf16.msra.mxu0 0
    %229 = vmatprep.subr.bf16.mxu0 0
    %230 = vmatpush1.bf16.msra.mxu0 0
    %231 = vmatprep.subr.bf16.mxu0 0
    %232 = vmatpush1.bf16.msra.mxu0 0
    %233 = vmatprep.subr.bf16.mxu0 0
    %234 = vmatpush1.bf16.msra.mxu0 0
    %235 = vmatprep.subr.bf16.mxu0 0
    %236 = vmatpush1.bf16.msra.mxu0 0
    %237 = vmatprep.subr.bf16.mxu0 0
    %238 = vmatpush1.bf16.msra.mxu0 0
    %239 = vmatprep.subr.bf16.mxu0 0
    %240 = vmatpush1.bf16.msra.mxu0 0
    %241 = vmatprep.subr.bf16.mxu0 0
    %242 = vmatpush1.bf16.msra.mxu0 0
    %243 = vmatprep.mubr.bf16.mxu0 0
    %244 = vmatmul.mubr.bf16.gmra.mrb[0].mxu0 %v140
    %v245 = vpop.f32.mrb[0].mxu0
    %v246 = vadd.f32 %v162, %v245
    %v247 = vpop.f32.mrb[0].mxu0
    %v248 = vpop.f32.mrb[0].mxu0
    %v249 = vpop.f32.mrb[0].mxu0
    %250 = vdwg.mxu0
    %v251 = vmax.f32 %v246, 0.0
    %v252 = vpack.c.bf16 %v251, %v251
    %s253 = scalar_lea.vmem [#allocation2], 128
    %v254 = vld [vmem:[%s253] sm:$0xf]
    %v255 = vld [vmem:[%s253 + $0x4] sm:$0xf]
    %v256 = vld [vmem:[%s253 + $0x8] sm:$0xf]
    %v257 = vld [vmem:[%s253 + $0xc] sm:$0xf]
    %v258 = vld [vmem:[%s253 + $0x10] sm:$0xf]
    %v259 = vld [vmem:[%s253 + $0x14] sm:$0xf]
    %v260 = vld [vmem:[%s253 + $0x18] sm:$0xf]
    %v261 = vld [vmem:[%s253 + $0x1c] sm:$0xf]
    %v262 = vld [vmem:[%s253 + $0x20] sm:$0xf]
    %v263 = vld [vmem:[%s253 + $0x24] sm:$0xf]
    %v264 = vld [vmem:[%s253 + $0x28] sm:$0xf]
    %v265 = vld [vmem:[%s253 + $0x2c] sm:$0xf]
    %v266 = vld [vmem:[%s253 + $0x30] sm:$0xf]
    %v267 = vld [vmem:[%s253 + $0x34] sm:$0xf]
    %v268 = vld [vmem:[%s253 + $0x38] sm:$0xf]
    %v269 = vld [vmem:[%s253 + $0x3c] sm:$0xf]
    %v270 = vld [vmem:[%s2 + $0x2] sm:$0x1]
    %v271 = vlaneseq
    %v272 = vshrl.u32 %v271, 7
    %v273 = vsub.s32 0, %v272
    %v274 = vrot.slane %v270, %v273
    %v291 = vunpack.c.l.b16 %v254
    %v292 = vunpack.c.l.b16 %v255
    %v293 = vunpack.c.l.b16 %v256
    %v294 = vunpack.c.l.b16 %v257
    %v295 = vunpack.c.l.b16 %v258
    %v296 = vunpack.c.l.b16 %v259
    %v297 = vunpack.c.l.b16 %v260
    %v298 = vunpack.c.l.b16 %v261
    %v299 = vunpack.c.l.b16 %v262
    %v300 = vunpack.c.l.b16 %v263
    %v301 = vunpack.c.l.b16 %v264
    %v302 = vunpack.c.l.b16 %v265
    %v303 = vunpack.c.l.b16 %v266
    %v304 = vunpack.c.l.b16 %v267
    %v305 = vunpack.c.l.b16 %v268
    %v306 = vunpack.c.l.b16 %v269
    %v307 = vpack.c.b16 %v292, %v291
    %v308 = vpack.c.b16 %v294, %v293
    %v309 = vpack.c.b16 %v296, %v295
    %v310 = vpack.c.b16 %v298, %v297
    %v311 = vpack.c.b16 %v300, %v299
    %v312 = vpack.c.b16 %v302, %v301
    %v313 = vpack.c.b16 %v304, %v303
    %v314 = vpack.c.b16 %v306, %v305
    %323 = vmatprep.subr.bf16.mxu0 0
    %324 = vmatpush1.bf16.msra.mxu0 %v307
    %325 = vmatprep.subr.bf16.mxu0 0
    %326 = vmatpush1.bf16.msra.mxu0 %v308
    %327 = vmatprep.subr.bf16.mxu0 0
    %328 = vmatpush1.bf16.msra.mxu0 %v309
    %329 = vmatprep.subr.bf16.mxu0 0
    %330 = vmatpush1.bf16.msra.mxu0 %v310
    %331 = vmatprep.subr.bf16.mxu0 0
    %332 = vmatpush1.bf16.msra.mxu0 %v311
    %333 = vmatprep.subr.bf16.mxu0 0
    %334 = vmatpush1.bf16.msra.mxu0 %v312
    %335 = vmatprep.subr.bf16.mxu0 0
    %336 = vmatpush1.bf16.msra.mxu0 %v313
    %337 = vmatprep.subr.bf16.mxu0 0
    %338 = vmatpush1.bf16.msra.mxu0 %v314
    %339 = vmatprep.subr.bf16.mxu0 0
    %340 = vmatpush1.bf16.msra.mxu0 0
    %341 = vmatprep.subr.bf16.mxu0 0
    %342 = vmatpush1.bf16.msra.mxu0 0
    %343 = vmatprep.subr.bf16.mxu0 0
    %344 = vmatpush1.bf16.msra.mxu0 0
    %345 = vmatprep.subr.bf16.mxu0 0
    %346 = vmatpush1.bf16.msra.mxu0 0
    %347 = vmatprep.subr.bf16.mxu0 0
    %348 = vmatpush1.bf16.msra.mxu0 0
    %349 = vmatprep.subr.bf16.mxu0 0
    %350 = vmatpush1.bf16.msra.mxu0 0
    %351 = vmatprep.subr.bf16.mxu0 0
    %352 = vmatpush1.bf16.msra.mxu0 0
    %353 = vmatprep.subr.bf16.mxu0 0
    %354 = vmatpush1.bf16.msra.mxu0 0
    %355 = vmatprep.mubr.bf16.mxu0 0
    %356 = vmatmul.mubr.bf16.gmra.mrb[0].mxu0 %v252
    %v357 = vpop.f32.mrb[0].mxu0
    %v358 = vadd.f32 %v274, %v357
    %v359 = vpop.f32.mrb[0].mxu0
    %v360 = vpop.f32.mrb[0].mxu0
    %v361 = vpop.f32.mrb[0].mxu0
    %362 = vdwg.mxu0
    %363 = vst [vmem:[%s3] sm:$0xff] %v358
    // Predicated region
    $region18: #{dqn_forward_packed.1} parent=1 // pred_check
      _
    $region19: #{dqn_forward_packed.1} parent=1 // pred_check_branch
      %365 = sbr.rel (0) target = $region21
    $region20: #{dqn_forward_packed.1} parent=1 // pred_region
      _
    $region21: #{dqn_forward_packed.1} parent=1 // pred_fallthru
      _
    // Predicated region
    $region22: #{dqn_forward_packed.1} parent=1 // pred_check
      _
    $region23: #{dqn_forward_packed.1} parent=1 // pred_check_branch
      %367 = sbr.rel (0) target = $region25
    $region24: #{dqn_forward_packed.1} parent=1 // pred_region
      _
    $region25: #{dqn_forward_packed.1} parent=1 // pred_fallthru
      _
    %368 = vsyncpa [#allocation3], 1

</llo_original>
